<compile_context>
chip_gen: v7x
topology: tpu7x:2x2x1
jax: 0.10.0
libtpu: 0.0.40
codegen_flags: <defaults>
</compile_context>

<pallas_src>
import functools

import numpy as np

import jax
import jax.numpy as jnp
from jax.experimental import pallas as pl
from jax.experimental.pallas import tpu as pltpu


def _round_up(x, m):
    return ((x + m - 1) // m) * m


def _int_thresholds(l, th):
    """Integer error-count cutoffs reproducing torch's float32 decision.

    class-1 iff bit_acc > th (and, double-tailed, also iff bit_acc < 1 - th),
    with bit_acc = 1 - err / L computed in float32.  bit_acc is monotone in the
    integer err, so the decision is fully captured by two integer cutoffs.
    """
    counts = np.arange(l + 1)
    bit_acc = np.float32(1.0) - counts.astype(np.float32) / np.float32(l)
    above = bit_acc > np.float32(th)           # bit_acc > th
    below = bit_acc < np.float32(1.0 - th)     # bit_acc < 1 - th
    err_lo = int(counts[above].max()) if above.any() else -1      # err <= err_lo
    err_hi = int(counts[below].min()) if below.any() else l + 1   # err >= err_hi
    return err_lo, err_hi


def _pick_tiling(rows, width, out_w):
    """Batch-tile rows + vmem_limit, generation-aware, using lane-padded sizes."""
    try:
        vmem_bytes = int(pltpu.get_tpu_info().vmem_capacity_bytes)
    except Exception:  # pragma: no cover - fallback is v7x-safe
        vmem_bytes = 64 * 1024 * 1024
    lane = 128
    in_row = _round_up(width, lane) * 4     # VMEM bytes per input row (lane padded)
    out_row = _round_up(out_w, lane) * 4    # VMEM bytes per output row (lane padded)
    per_row = 2 * (in_row + out_row)        # double-buffered input + output
    budget = max(1 << 20, vmem_bytes // 4)  # keep working set <= 1/4 of physical VMEM
    cap = max(8, (budget // per_row) // 8 * 8)

    rows8 = _round_up(rows, 8)
    if rows8 <= cap:
        if rows * in_row >= (4 << 20):
            # Big enough that several grid steps amortize their overhead and
            # let v7x's two TensorCores split the batch.
            tile_rows = max(8, _round_up(pl.cdiv(rows8, 4), 8))
        else:
            tile_rows = rows8               # single fat block, one grid step
    else:
        tile_rows = cap

    needed = tile_rows * per_row + 16 * _round_up(width, lane) * 4
    vmem_limit = int(min(vmem_bytes // 2, max(2 * needed, 16 << 20)))
    return tile_rows, vmem_limit


def _class_layer_kernel(msg_ref, dec_ref, out_ref, *, l, k, err_lo, err_hi,
                        double_tailed, onehot):
    # round -> clamp -> |diff| -> per-row error count -> integer threshold.
    dec = jnp.clip(jnp.round(dec_ref[...]), 0.0, 1.0)        # [tile, k*L] f32
    diff = jnp.abs(dec - msg_ref[...])                        # broadcast [1, k*L]

    if k == 1:
        err = jnp.sum(diff, axis=1, keepdims=True)            # [tile, 1]
    else:
        # Segment-sum over the k folded rows via a constant [k*L, k] 0/1 matrix
        # -> the reduction runs on the otherwise-idle MXU, lanes stay dense.
        n = k * l
        col = jax.lax.broadcasted_iota(jnp.int32, (n, k), 1)
        seg = jax.lax.broadcasted_iota(jnp.int32, (n, k), 0) // l
        sel = (col == seg).astype(jnp.float32)
        err = jnp.dot(diff, sel, preferred_element_type=jnp.float32)  # [tile, k]

    err_i = err.astype(jnp.int32)                              # exact small ints
    if double_tailed:
        cls = jnp.logical_or(err_i <= err_lo, err_i >= err_hi)
    else:
        cls = err_i <= err_lo
    cls_i = cls.astype(jnp.int32)                              # {0, 1}

    if onehot:
        # F.one_hot(class_idx, 2): class 0 -> [1,0], class 1 -> [0,1].
        iota = jax.lax.broadcasted_iota(jnp.int32, out_ref.shape, 1)  # [tile, 2]
        out_ref[...] = (iota == cls_i).astype(jnp.int32)
    else:
        out_ref[...] = cls_i                                   # [tile, k] class ids


def class_layer_forward(decoded_messages, message, detector_type="double-tailed",
                        th=0.8, pack_min_bytes=1 << 20):
    """Pallas implementation of Class_Layer.forward.

    decoded_messages: [B, L] float32
    message:          [L] or [1, L] float32 ground-truth watermark bits
    returns:          [B, 2] int32 one-hot class indicator
    """
    if detector_type not in ("double-tailed", "single-tailed"):
        raise ValueError(f"unknown detector_type: {detector_type}")

    decoded_messages = jnp.asarray(decoded_messages, jnp.float32)
    message = jnp.asarray(message, jnp.float32).reshape(1, -1)
    b, l = decoded_messages.shape
    assert message.shape[1] == l

    err_lo, err_hi = _int_thresholds(l, th)
    double_tailed = detector_type == "double-tailed"

    # Lane-dense fold: k = 128 // L rows per packed row, only when the batch is
    # big enough that the kernel isn't pure launch overhead.
    use_pack = (l < 128) and (128 % l == 0) and (b * l * 4 >= pack_min_bytes) \
        and (b >= 128 // l)

    if use_pack:
        k = 128 // l
        rows = -(-b // k)
        b_k = rows * k
        if b_k != b:
            # Tiny tail pad (< k <= 16 rows) so rows fold cleanly into 128 lanes.
            decoded_messages = jnp.pad(decoded_messages, ((0, b_k - b), (0, 0)))
        dec2 = decoded_messages.reshape(rows, k * l)   # free view: contiguous rows
        msg2 = jnp.tile(message, (1, k))               # [1, k*L]
        out_w = k
        onehot_in_kernel = False
    else:
        k = 1
        rows = b
        dec2 = decoded_messages
        msg2 = message
        out_w = 2
        onehot_in_kernel = True

    width = k * l
    tile_rows, vmem_limit = _pick_tiling(rows, width, out_w)

    kernel = functools.partial(
        _class_layer_kernel, l=l, k=k, err_lo=err_lo, err_hi=err_hi,
        double_tailed=double_tailed, onehot=onehot_in_kernel)

    out = pl.pallas_call(
        kernel,
        out_shape=jax.ShapeDtypeStruct((rows, out_w), jnp.int32),
        grid=(pl.cdiv(rows, tile_rows),),              # partial tail block masked
        in_specs=[
            pl.BlockSpec((1, width), lambda i: (0, 0)),          # message (resident)
            pl.BlockSpec((tile_rows, width), lambda i: (i, 0)),  # decoded tile
        ],
        out_specs=pl.BlockSpec((tile_rows, out_w), lambda i: (i, 0)),
        compiler_params=pltpu.CompilerParams(
            dimension_semantics=("parallel",),         # shards tiles over v7x's 2 TCs
            vmem_limit_bytes=vmem_limit,
        ),
        cost_estimate=pl.CostEstimate(
            flops=6 * rows * width,
            transcendentals=0,
            bytes_accessed=rows * width * 4 + rows * out_w * 4 + width * 4,
        ),
    )(msg2, dec2)

    if onehot_in_kernel:
        return out                                      # [B, 2] already

    cls = out.reshape(rows * k)[:b]                     # [B] int32 class index
    return (cls[:, None] == jnp.arange(2, dtype=jnp.int32)[None, :]).astype(jnp.int32)


if __name__ == "__main__":
    key = jax.random.PRNGKey(0)
    k_msg, k_dec, k_big, k_pack = jax.random.split(key, 4)

    B, L, TH = 2, 32, 0.8

    # Ground-truth watermark bits (0/1 floats), as Class_Layer.__init__ stores.
    message = jax.random.bernoulli(k_msg, 0.5, (L,)).astype(jnp.float32)
    # Decoded messages: raw decoder outputs around [0, 1].
    decoded = jax.random.uniform(k_dec, (B, L), jnp.float32, minval=-0.2, maxval=1.2)

    def ref_fn(dec, msg, detector_type, th):
        dec_q = jnp.clip(jnp.round(dec), 0.0, 1.0)
        ll = msg.shape[-1]
        bit_acc = 1.0 - jnp.sum(jnp.abs(dec_q - msg.reshape(1, -1)), axis=1) / ll
        if detector_type == "double-tailed":
            cls = jnp.logical_or(bit_acc > th, bit_acc < 1 - th)
        else:
            cls = bit_acc > th
        return jax.nn.one_hot(cls.astype(jnp.int32), 2, dtype=jnp.int32)

    out_dt = class_layer_forward(decoded, message, "double-tailed", TH)
    out_st = class_layer_forward(decoded, message, "single-tailed", TH)
    jax.block_until_ready((out_dt, out_st))
    assert out_dt.shape == (B, 2) and out_st.shape == (B, 2)
    assert jnp.array_equal(out_dt, ref_fn(decoded, message, "double-tailed", TH))
    assert jnp.array_equal(out_st, ref_fn(decoded, message, "single-tailed", TH))

    # Partial tail block (B not a multiple of the tile): no wrapper pad needed.
    B2 = 300
    decoded_big = jax.random.uniform(k_big, (B2, L), jnp.float32, minval=-0.2, maxval=1.2)
    out_big = class_layer_forward(decoded_big, message, "double-tailed", TH)
    jax.block_until_ready(out_big)
    assert out_big.shape == (B2, 2)
    assert jnp.array_equal(out_big, ref_fn(decoded_big, message, "double-tailed", TH))

    # Lane-packed (MXU segment-sum) path, forced on, with B not a multiple of k.
    B3 = 510
    decoded_pack = jax.random.uniform(k_pack, (B3, L), jnp.float32, minval=-0.2, maxval=1.2)
    out_pack = class_layer_forward(decoded_pack, message, "double-tailed", TH,
                                   pack_min_bytes=0)
    jax.block_until_ready(out_pack)
    assert out_pack.shape == (B3, 2)
    assert jnp.array_equal(out_pack, ref_fn(decoded_pack, message, "double-tailed", TH))

    # Exact-threshold boundary: th = 0.75 with rows having 7 / 8 / 9 wrong bits.
    TH2 = 0.75
    idx = jnp.arange(L)
    decoded_edge = jnp.stack(
        [jnp.where(idx < n, 1.0 - message, message) for n in (7, 8, 9)])
    out_edge_dt = class_layer_forward(decoded_edge, message, "double-tailed", TH2)
    out_edge_st = class_layer_forward(decoded_edge, message, "single-tailed", TH2)
    jax.block_until_ready((out_edge_dt, out_edge_st))
    assert jnp.array_equal(out_edge_dt, ref_fn(decoded_edge, message, "double-tailed", TH2))
    assert jnp.array_equal(out_edge_st, ref_fn(decoded_edge, message, "single-tailed", TH2))

    print("KERNEL_OK")
</pallas_src>

<mosaic_0001>
module attributes {stable_mosaic.version = 11 : i64} {
  func.func @_class_layer_kernel(%arg0: i32, %arg1: memref<1x32xf32, #tpu.memory_space<vmem>>, %arg2: memref<8x32xf32, #tpu.memory_space<vmem>>, %arg3: memref<8x2xi32, #tpu.memory_space<vmem>>) attributes {dimension_semantics = [#tpu.dimension_semantics<parallel>], iteration_bounds = array<i64: 1>, scalar_prefetch = 0 : i64, scratch_operands = 0 : i64, tpu.core_type = #tpu.core_type<tc>, window_params = [{pipeline_mode = #tpu.pipeline_mode<synchronous>, transform_indices = @transform_0, window_bounds = array<i64: 1, 32>}, {transform_indices = @transform_1, window_bounds = array<i64: 8, 32>}, {transform_indices = @transform_2, window_bounds = array<i64: 8, 2>}]} {
    %c0 = arith.constant 0 : index
    %c0_0 = arith.constant 0 : index
    %0 = vector.load %arg2[%c0, %c0_0] : memref<8x32xf32, #tpu.memory_space<vmem>>, vector<8x32xf32>
    %1 = math.roundeven %0 : vector<8x32xf32>
    %cst = arith.constant 0.000000e+00 : f32
    %cst_1 = arith.constant 1.000000e+00 : f32
    %2 = vector.broadcast %cst : f32 to vector<8x32xf32>
    %3 = arith.maximumf %2, %1 : vector<8x32xf32>
    %4 = vector.broadcast %cst_1 : f32 to vector<8x32xf32>
    %5 = arith.minimumf %4, %3 : vector<8x32xf32>
    %c0_2 = arith.constant 0 : index
    %c0_3 = arith.constant 0 : index
    %6 = vector.load %arg1[%c0_2, %c0_3] : memref<1x32xf32, #tpu.memory_space<vmem>>, vector<1x32xf32>
    %7 = vector.broadcast %6 : vector<1x32xf32> to vector<8x32xf32>
    %8 = arith.subf %5, %7 : vector<8x32xf32>
    %9 = math.absf %8 : vector<8x32xf32>
    %cst_4 = arith.constant dense<0.000000e+00> : vector<8xf32>
    %10 = vector.multi_reduction <add>, %9, %cst_4 [1] : vector<8x32xf32> to vector<8xf32>
    %11 = vector.shape_cast %10 : vector<8xf32> to vector<8x1xf32>
    %12 = arith.fptosi %11 : vector<8x1xf32> to vector<8x1xi32>
    %c6_i32 = arith.constant 6 : i32
    %13 = vector.broadcast %c6_i32 : i32 to vector<8x1xi32>
    %14 = arith.cmpi sle, %12, %13 : vector<8x1xi32>
    %c26_i32 = arith.constant 26 : i32
    %15 = vector.broadcast %c26_i32 : i32 to vector<8x1xi32>
    %16 = arith.cmpi sge, %12, %15 : vector<8x1xi32>
    %17 = arith.ori %14, %16 : vector<8x1xi1>
    %18 = arith.extui %17 : vector<8x1xi1> to vector<8x1xi32>
    %19 = tpu.iota {dimensions = array<i32: 1>} : vector<8x2xi32>
    %20 = vector.broadcast %18 : vector<8x1xi32> to vector<8x2xi32>
    %21 = arith.cmpi eq, %19, %20 : vector<8x2xi32>
    %22 = arith.extui %21 : vector<8x2xi1> to vector<8x2xi32>
    %c0_5 = arith.constant 0 : index
    %c0_6 = arith.constant 0 : index
    %23 = vector.load %arg3[%c0_5, %c0_6] : memref<8x2xi32, #tpu.memory_space<vmem>>, vector<8x2xi32>
    tpu.vector_store %arg3[%c0_5, %c0_6], %22 {strides = array<i32>} : memref<8x2xi32, #tpu.memory_space<vmem>>, vector<8x2xi32>,
    return
  }
  func.func @transform_0(%arg0: i32) -> (i32, i32) {
    %c0_i32 = arith.constant 0 : i32
    %c0_i32_0 = arith.constant 0 : i32
    %c0_i32_1 = arith.constant 0 : i32
    return %c0_i32, %c0_i32_0 : i32, i32
  }
  func.func @transform_1(%arg0: i32) -> (i32, i32) {
    %c0_i32 = arith.constant 0 : i32
    %c0_i32_0 = arith.constant 0 : i32
    return %arg0, %c0_i32 : i32, i32
  }
  func.func @transform_2(%arg0: i32) -> (i32, i32) {
    %c0_i32 = arith.constant 0 : i32
    %c0_i32_0 = arith.constant 0 : i32
    return %arg0, %c0_i32 : i32, i32
  }
}

</mosaic_0001>

<llo_original>
// kernel: tpu_custom_call.1
$region0: #{tpu_custom_call.1}
  #allocation0 [shape = 'u32[]', space=smem, size = 0x4, offset = 0x4, fixed_abs, tag = 'smem constant byte address 0x4 - core index']
  #allocation1 [shape = 'u32[144,128]{1,0:T(1,128)}', space=vmem, size = 0x12000, scoped, tag = 'internal scratch']
  %s0 = inlined_call_operand.hbm [shape: f32[1,32], index: 0, kind: input, shape index: {}]
  %s1 = inlined_call_operand.vmem [shape: f32[2,32], index: 1, kind: input, shape index: {}]
  %s2 = inlined_call_operand.hbm [shape: s32[2,2], index: 2, kind: output, shape index: {}]
  %s3 = sld [smem:[#allocation0]]
  $region22: #{tpu_custom_call.1} parent=0
    _
  %s5 = ssub.s32 1, %s3
  %s6 = scalar_select 0, %s5, %s3
  $region1: #{tpu_custom_call.1} parent=0
    #allocation2 [shape = 'u8[512]{0}', space=vmem, size = 0x400, scoped, tag = 'input window, operand 0, single buffered']
    #allocation3 [shape = 's32[1]{0}', space=sflag, size = 0x4, scoped, tag = 'scoped memory for tpu_custom_call.1']
    #allocation4 [shape = 's32[1]{0}', space=sflag, size = 0x4, scoped, tag = 'scoped memory for tpu_custom_call.1']
    #allocation5 [shape = 'u8[4096]{0}', space=vmem, size = 0x1000, scoped, tag = 'output window, operand 0, single buffered']
    %7 = vsyncpa [#allocation3], 0
    %8 = vsyncpa [#allocation4], 0
    // Predicated region
    $region2: #{tpu_custom_call.1} parent=1 // pred_check
      _
    $region3: #{tpu_custom_call.1} parent=1 // pred_check_branch
      %10 = sbr.rel (0) target = $region5
    $region4: #{tpu_custom_call.1} parent=1 // pred_region
      %s12 = ssub.s32 16, 16
      %13 = vsyncadd [#allocation3], %s12
      %s15 = sshll.u32 [#allocation2], 4
      %s16 = int_to_ptr.vmem [resolvable:$true] %s15
      %18 = dma.hbm_to_vmem [thread:$0]  %s0, 16, %s16, [#allocation3]
    $region5: #{tpu_custom_call.1} parent=1 // pred_fallthru
      _
    // Predicated region
    $region6: #{tpu_custom_call.1} parent=1 // pred_check
      _
    $region7: #{tpu_custom_call.1} parent=1 // pred_check_branch
      %20 = sbr.rel (0) target = $region9
    $region8: #{tpu_custom_call.1} parent=1 // pred_region
      _
    $region9: #{tpu_custom_call.1} parent=1 // pred_fallthru
      _
    // Predicated region
    $region10: #{tpu_custom_call.1} parent=1 // pred_check
      _
    $region11: #{tpu_custom_call.1} parent=1 // pred_check_branch
      %22 = sbr.rel (0) target = $region13
    $region12: #{tpu_custom_call.1} parent=1 // pred_region
      %23 = dma.done [#allocation3], 16
    $region13: #{tpu_custom_call.1} parent=1 // pred_fallthru
      _
    %v24 = vld [vmem:[%s1] sm:$0xff]
    %v25 = vround.ne.pseudo %v24
    %v26 = vmax.f32 %v25, 0.0
    %v27 = vmin.f32 %v26, 1.0
    %v28 = vld [vmem:[#allocation2] sm:$0x1]
    %v30 = vlaneseq
    %v31 = vshrl.u32 %v30, 7
    %v32 = vsub.s32 0, %v31
    %v33 = vrot.slane %v28, %v32
    %v35 = vsub.f32 %v27, %v33
    %v36 = vand.u32 2147483647, %v35
    %vm37 = vcmask 261120
    %v38 = vsel %vm37, %v36, 0.0
    %39 = vadd.xlane.f32.xlu0 %v38
    %v40 = vpop.xlane.xlu0 %39
    %v41 = vcvt.f32.s32.to.zero.pseudo %v40
    %vm42 = vcmp.le.s32.totalorder %v41, 6
    %vm43 = vcmp.ge.s32.totalorder %v41, 26
    %vm44 = vmor %vm42, %vm43
    %v45 = vsel %vm44, 1, 0
    %v46 = vlaneseq
    %v47 = vand.u32 %v46, 127
    %vm48 = vcmp.eq.s32.totalorder %v47, %v45
    %v49 = vsel %vm48, 1, 0
    %vm50 = vcmask 15360
    %51 = vst.msk [vmem:[#allocation5] sm:$0xff] %vm50, %v49
    // Predicated region
    $region14: #{tpu_custom_call.1} parent=1 // pred_check
      _
    $region15: #{tpu_custom_call.1} parent=1 // pred_check_branch
      %53 = sbr.rel (0) target = $region17
    $region16: #{tpu_custom_call.1} parent=1 // pred_region
      %s55 = ssub.s32 128, 32
      %56 = vsyncadd [#allocation4], %s55
      %s57 = sshll.u32 [#allocation5], 4
      %s58 = int_to_ptr.vmem [resolvable:$true] %s57
      %63 = dma.vmem_to_hbm [thread:$0]  %s58, 32, %s2, [#allocation4], 32, 32, 2
    $region17: #{tpu_custom_call.1} parent=1 // pred_fallthru
      _
    // Predicated region
    $region18: #{tpu_custom_call.1} parent=1 // pred_check
      _
    $region19: #{tpu_custom_call.1} parent=1 // pred_check_branch
      %65 = sbr.rel (0) target = $region21
    $region20: #{tpu_custom_call.1} parent=1 // pred_region
      %66 = dma.done [#allocation4], 128
    $region21: #{tpu_custom_call.1} parent=1 // pred_fallthru
      _
    %67 = vsyncpa [#allocation3], 1
    %68 = vsyncpa [#allocation4], 1

</llo_original>
